<compile_context>
chip_gen: v5e
topology: v5e:2x2
jax: 0.10.0
libtpu: 0.0.40
codegen_flags: <defaults>
</compile_context>

<pallas_src>
import jax
import jax.numpy as jnp
from jax.experimental import pallas as pl
from jax.experimental.pallas import tpu as pltpu


def _conv1d_relu_kernel(xm_ref, xh_ref, wb_ref, b_ref, o_ref):
    """One tile: banded-weight matmul Conv1d(in_ch=1) + bias + ReLU.

    xm_ref: (1, R, 128)     main signal rows:  xm[r, l] = x[nt*TM + 128*r + l]
    xh_ref: (1, 8, 128)     halo rows (only row 0 used): x[(nt+1)*TM + l]
    wb_ref: (256, 128*C)    banded Toeplitz weight  W[p, i*C + c] = w[c, p - i]
    b_ref:  (1, 128*C)      bias broadcast over the 128 time positions
    o_ref:  (1, 1, R, 128*C) output tile, already [time, channel] row-major
    """
    xm = xm_ref[0]                                    # (R, 128)
    xh = xh_ref[0, :1]                                # (1, 128)
    # Shift-by-one-row view: xs[r, l] = x[nt*TM + 128*(r+1) + l]
    xs = jnp.concatenate([xm[1:], xh], axis=0)        # (R, 128)
    # X2[r, p] = x[nt*TM + 128*r + p], p in [0, 256): two lane-aligned halves.
    x2 = jnp.concatenate([xm, xs], axis=1)            # (R, 256)
    acc = jnp.dot(x2, wb_ref[...], preferred_element_type=jnp.float32)  # (R, 128*C)
    acc = acc + b_ref[...]
    o_ref[0, 0] = jnp.maximum(acc, 0.0).astype(o_ref.dtype)


def _round_up(x, m):
    return ((x + m - 1) // m) * m


def cnn_forward(x, weight, bias, *, tile_m=16384):
    """Conv1d(in=1, out=C, kernel=K, stride=1) -> ReLU -> permute(0,2,1).

    x: [B, 1, L]; weight: [C, 1, K]; bias: [C].  Returns [B, Lout, C], Lout = L - K + 1.
    """
    x = x.astype(jnp.float32)
    weight = weight.astype(jnp.float32)
    bias = bias.astype(jnp.float32)

    B, Cin, L = x.shape
    assert Cin == 1
    C, _, K = weight.shape
    Lout = L - K + 1
    assert Lout >= 1
    assert K <= 129, "banded-weight kernel assumes 128 + K - 1 <= 256"

    # TM output samples per tile; multiple of 1024 so R = TM/128 is a multiple of 8
    # (keeps every block second-minor dim 8-aligned).
    TM = max(1024, min(_round_up(int(tile_m), 1024), _round_up(Lout, 1024)))
    NT = pl.cdiv(Lout, TM)
    # v7x megacore: keep the grid at >= 2 steps when there is enough work.
    if B * NT < 2 and Lout > 1024:
        TM = _round_up(pl.cdiv(Lout, 2), 1024)
        NT = pl.cdiv(Lout, TM)
    R = TM // 128

    # Padded signal: NT*TM main samples + 8*128 so the halo block of the last tile exists.
    Lpad = NT * TM + 1024
    xp = jnp.pad(x[:, 0, :], ((0, 0), (0, Lpad - L)))          # [B, Lpad]
    xpr = xp.reshape(B, Lpad // 128, 128)                      # free contiguous reshape

    # Banded (Toeplitz) weight: W_band[p, i*C + c] = w[c, p - i] inside the band, else 0.
    P = 256
    p_idx = jnp.arange(P)[:, None]                             # (P, 1)
    i_idx = jnp.arange(128)[None, :]                           # (1, 128)
    k_idx = p_idx - i_idx                                      # (P, 128)
    in_band = (k_idx >= 0) & (k_idx < K)
    wk = weight[:, 0, :].T                                     # (K, C)
    band = jnp.where(in_band[:, :, None], wk[jnp.clip(k_idx, 0, K - 1)], 0.0)  # (P,128,C)
    w_band = band.reshape(P, 128 * C)                          # (256, 128*C) ~1 MiB, resident
    b_col = jnp.tile(bias, 128).reshape(1, 128 * C)            # bias[col % C]

    cost = pl.CostEstimate(
        flops=2 * B * NT * R * P * 128 * C,
        transcendentals=0,
        bytes_accessed=int(4 * (B * Lpad + P * 128 * C + 128 * C + B * NT * TM * C)),
    )

    out = pl.pallas_call(
        _conv1d_relu_kernel,
        out_shape=jax.ShapeDtypeStruct((B, NT, R, 128 * C), jnp.float32),
        grid=(B, NT),
        in_specs=[
            # Main tile: rows [nt*R, (nt+1)*R) of the 128-wide signal rows.
            pl.BlockSpec((1, R, 128), lambda b, nt: (b, nt, 0)),
            # Halo: 8 rows starting at row (nt+1)*R (only the first row is used).
            pl.BlockSpec((1, 8, 128), lambda b, nt: (b, (nt + 1) * (R // 8), 0)),
            # Resident banded weight + bias (constant index_map -> fetched once).
            pl.BlockSpec((P, 128 * C), lambda b, nt: (0, 0)),
            pl.BlockSpec((1, 128 * C), lambda b, nt: (0, 0)),
        ],
        out_specs=pl.BlockSpec((1, 1, R, 128 * C), lambda b, nt: (b, nt, 0, 0)),
        compiler_params=pltpu.CompilerParams(
            dimension_semantics=("parallel", "parallel"),
        ),
        cost_estimate=cost,
    )(xpr, xpr, w_band, b_col)

    # (B, NT, R, 128*C) is already [B, time, C] row-major: free reshape + tail slice.
    y = out.reshape(B, NT * TM, C)
    if NT * TM != Lout:
        y = y[:, :Lout, :]
    return y


def _reference(x, weight, bias):
    # Pure-JAX reference: Conv1d -> ReLU -> permute(0,2,1)
    x = x.astype(jnp.float32)
    B, _, L = x.shape
    C, _, K = weight.shape
    Lout = L - K + 1
    idx = jnp.arange(Lout)[:, None] + jnp.arange(K)[None, :]
    patches = x[:, 0, :][:, idx]                                      # [B, Lout, K]
    out = jnp.einsum("blk,ck->blc", patches, weight[:, 0, :],
                     precision=jax.lax.Precision.HIGHEST) + bias      # [B, Lout, C]
    return jnp.maximum(out, 0.0)


if __name__ == "__main__":
    key = jax.random.PRNGKey(0)
    k_x, k_w, k_b, k_x2 = jax.random.split(key, 4)

    out_channel = 8
    K = 24
    # Deterministic Conv1d-style init (uniform in +/- 1/sqrt(fan_in), fan_in = 1*K)
    bound = 1.0 / (K ** 0.5)
    weight = jax.random.uniform(k_w, (out_channel, 1, K), jnp.float32, -bound, bound)
    bias = jax.random.uniform(k_b, (out_channel,), jnp.float32, -bound, bound)

    # Case 1: small single-tile signal.
    B, L = 2, 64
    x = jax.random.normal(k_x, (B, 1, L), dtype=jnp.float32)
    y = jax.block_until_ready(cnn_forward(x, weight, bias))
    y_ref = _reference(x, weight, bias)
    assert y.shape == (B, L - K + 1, out_channel), y.shape
    err = float(jnp.max(jnp.abs(y - y_ref)))
    assert jnp.allclose(y, y_ref, atol=1e-4, rtol=1e-4), f"single-tile mismatch, max err {err}"

    # Case 2: multi-tile path (NT > 1) exercising halo fetch, TM clamp and tail slice.
    B2, L2 = 2, 5000
    x2 = jax.random.normal(k_x2, (B2, 1, L2), dtype=jnp.float32)
    y2 = jax.block_until_ready(cnn_forward(x2, weight, bias, tile_m=2048))
    y2_ref = _reference(x2, weight, bias)
    assert y2.shape == (B2, L2 - K + 1, out_channel), y2.shape
    err2 = float(jnp.max(jnp.abs(y2 - y2_ref)))
    assert jnp.allclose(y2, y2_ref, atol=1e-4, rtol=1e-4), f"multi-tile mismatch, max err {err2}"

    print("KERNEL_OK")
</pallas_src>

<mosaic_0001>
module attributes {stable_mosaic.version = 11 : i64} {
  func.func @_conv1d_relu_kernel(%arg0: i32, %arg1: i32, %arg2: memref<1x8x128xf32, #tpu.memory_space<vmem>>, %arg3: memref<1x8x128xf32, #tpu.memory_space<vmem>>, %arg4: memref<256x1024xf32, #tpu.memory_space<vmem>>, %arg5: memref<1x1024xf32, #tpu.memory_space<vmem>>, %arg6: memref<1x1x8x1024xf32, #tpu.memory_space<vmem>>) attributes {dimension_semantics = [#tpu.dimension_semantics<parallel>, #tpu.dimension_semantics<parallel>], iteration_bounds = array<i64: 2, 1>, scalar_prefetch = 0 : i64, scratch_operands = 0 : i64, tpu.core_type = #tpu.core_type<tc>, window_params = [{transform_indices = @transform_0, window_bounds = array<i64: 1, 8, 128>}, {transform_indices = @transform_1, window_bounds = array<i64: 1, 8, 128>}, {pipeline_mode = #tpu.pipeline_mode<synchronous>, transform_indices = @transform_2, window_bounds = array<i64: 256, 1024>}, {pipeline_mode = #tpu.pipeline_mode<synchronous>, transform_indices = @transform_3, window_bounds = array<i64: 1, 1024>}, {transform_indices = @transform_4, window_bounds = array<i64: 1, 1, 8, 1024>}]} {
    %c0 = arith.constant 0 : index
    %c0_0 = arith.constant 0 : index
    %c0_1 = arith.constant 0 : index
    %0 = vector.load %arg2[%c0, %c0_0, %c0_1] : memref<1x8x128xf32, #tpu.memory_space<vmem>>, vector<1x8x128xf32>
    %1 = vector.shape_cast %0 : vector<1x8x128xf32> to vector<8x128xf32>
    %c0_2 = arith.constant 0 : index
    %c0_3 = arith.constant 0 : index
    %c0_4 = arith.constant 0 : index
    %2 = vector.load %arg3[%c0_2, %c0_3, %c0_4] : memref<1x8x128xf32, #tpu.memory_space<vmem>>, vector<1x1x128xf32>
    %3 = vector.shape_cast %2 : vector<1x1x128xf32> to vector<1x128xf32>
    %4 = vector.extract_strided_slice %1 {offsets = [1, 0], sizes = [7, 128], strides = [1, 1]} : vector<8x128xf32> to vector<7x128xf32>
    %5 = tpu.concatenate %4, %3 in 0 : vector<7x128xf32>, vector<1x128xf32> -> vector<8x128xf32>
    %6 = tpu.concatenate %1, %5 in 1 : vector<8x128xf32>, vector<8x128xf32> -> vector<8x256xf32>
    %c0_5 = arith.constant 0 : index
    %c0_6 = arith.constant 0 : index
    %7 = vector.load %arg4[%c0_5, %c0_6] : memref<256x1024xf32, #tpu.memory_space<vmem>>, vector<256x1024xf32>
    %cst = arith.constant dense<0.000000e+00> : vector<8x1024xf32>
    %8 = tpu.matmul %6, %7, %cst {dimension_numbers = #tpu.dot_dimension_numbers<[1], [0], [0], [1], [0, 0, 1, 1], [], []>} : vector<8x256xf32>, vector<256x1024xf32>, vector<8x1024xf32> -> vector<8x1024xf32>
    %c0_7 = arith.constant 0 : index
    %c0_8 = arith.constant 0 : index
    %9 = vector.load %arg5[%c0_7, %c0_8] : memref<1x1024xf32, #tpu.memory_space<vmem>>, vector<1x1024xf32>
    %10 = vector.broadcast %9 : vector<1x1024xf32> to vector<8x1024xf32>
    %11 = arith.addf %8, %10 : vector<8x1024xf32>
    %cst_9 = arith.constant 0.000000e+00 : f32
    %12 = vector.broadcast %cst_9 : f32 to vector<8x1024xf32>
    %13 = arith.maximumf %11, %12 : vector<8x1024xf32>
    %c0_10 = arith.constant 0 : index
    %c0_11 = arith.constant 0 : index
    %c0_12 = arith.constant 0 : index
    %c0_13 = arith.constant 0 : index
    %14 = vector.load %arg6[%c0_10, %c0_11, %c0_12, %c0_13] : memref<1x1x8x1024xf32, #tpu.memory_space<vmem>>, vector<1x1x8x1024xf32>
    %15 = vector.shape_cast %14 : vector<1x1x8x1024xf32> to vector<8x1024xf32>
    %16 = vector.shape_cast %13 : vector<8x1024xf32> to vector<1x1x8x1024xf32>
    tpu.vector_store %arg6[%c0_10, %c0_11, %c0_12, %c0_13], %16 {strides = array<i32>} : memref<1x1x8x1024xf32, #tpu.memory_space<vmem>>, vector<1x1x8x1024xf32>,
    return
  }
  func.func @transform_0(%arg0: i32, %arg1: i32) -> (i32, i32, i32) {
    %c0_i32 = arith.constant 0 : i32
    %c0_i32_0 = arith.constant 0 : i32
    return %arg0, %arg1, %c0_i32 : i32, i32, i32
  }
  func.func @transform_1(%arg0: i32, %arg1: i32) -> (i32, i32, i32) {
    %c1_i32 = arith.constant 1 : i32
    %0 = arith.addi %arg1, %c1_i32 : i32
    %c1_i32_0 = arith.constant 1 : i32
    %1 = arith.muli %0, %c1_i32_0 : i32
    %c0_i32 = arith.constant 0 : i32
    %c0_i32_1 = arith.constant 0 : i32
    return %arg0, %1, %c0_i32 : i32, i32, i32
  }
  func.func @transform_2(%arg0: i32, %arg1: i32) -> (i32, i32) {
    %c0_i32 = arith.constant 0 : i32
    %c0_i32_0 = arith.constant 0 : i32
    %c0_i32_1 = arith.constant 0 : i32
    return %c0_i32, %c0_i32_0 : i32, i32
  }
  func.func @transform_3(%arg0: i32, %arg1: i32) -> (i32, i32) {
    %c0_i32 = arith.constant 0 : i32
    %c0_i32_0 = arith.constant 0 : i32
    %c0_i32_1 = arith.constant 0 : i32
    return %c0_i32, %c0_i32_0 : i32, i32
  }
  func.func @transform_4(%arg0: i32, %arg1: i32) -> (i32, i32, i32, i32) {
    %c0_i32 = arith.constant 0 : i32
    %c0_i32_0 = arith.constant 0 : i32
    %c0_i32_1 = arith.constant 0 : i32
    return %arg0, %arg1, %c0_i32, %c0_i32_0 : i32, i32, i32, i32
  }
}

</mosaic_0001>

<llo_original>
// kernel: tpu_custom_call.1
$region0: #{tpu_custom_call.1}
  #allocation0 [shape = 'u32[]', space=smem, size = 0x4, offset = 0x4, fixed_abs, tag = 'smem constant byte address 0x4 - core index']
  #allocation1 [shape = 'u32[72,128]{1,0:T(1,128)}', space=vmem, size = 0x9000, scoped, tag = 'internal scratch']
  %s0 = inlined_call_operand.hbm [shape: f32[2,16,128], index: 0, kind: input, shape index: {}]
  %s1 = inlined_call_operand.hbm [shape: f32[2,16,128], index: 1, kind: input, shape index: {}]
  %s2 = inlined_call_operand.hbm [shape: f32[256,1024], index: 2, kind: input, shape index: {}]
  %s3 = inlined_call_operand.hbm [shape: f32[1,1024], index: 3, kind: input, shape index: {}]
  %s4 = inlined_call_operand.hbm [shape: f32[2,1,8,1024], index: 4, kind: output, shape index: {}]
  %s5 = sld [smem:[#allocation0]]
  $region65: #{tpu_custom_call.1} parent=0
    _
  %s7 = ssub.s32 1, %s5
  %s8 = scalar_select 0, %s7, %s5
  $region1: #{tpu_custom_call.1} parent=0
    #allocation2 [shape = 'u8[8192]{0}', space=vmem, size = 0x2000, scoped, tag = 'input window, operand 0']
    #allocation3 [shape = 's32[2]{0}', space=sflag, size = 0x8, scoped, tag = 'scoped memory for tpu_custom_call.1']
    #allocation4 [shape = 's32[2]{0}', space=sflag, size = 0x8, scoped, tag = 'scoped memory for tpu_custom_call.1']
    #allocation5 [shape = 'u8[8192]{0}', space=vmem, size = 0x2000, scoped, tag = 'input window, operand 1']
    #allocation6 [shape = 's32[2]{0}', space=sflag, size = 0x8, scoped, tag = 'scoped memory for tpu_custom_call.1']
    #allocation7 [shape = 'u8[1048576]{0}', space=vmem, size = 0x100000, scoped, tag = 'input window, operand 2, single buffered']
    #allocation8 [shape = 'u8[4096]{0}', space=vmem, size = 0x1000, scoped, tag = 'input window, operand 3, single buffered']
    #allocation9 [shape = 's32[1]{0}', space=sflag, size = 0x4, scoped, tag = 'scoped memory for tpu_custom_call.1']
    #allocation10 [shape = 'u8[65536]{0}', space=vmem, size = 0x10000, scoped, tag = 'output window, operand 0']
    %9 = vsyncpa [#allocation3], 0
    %s10 = scalar_lea.sflag [#allocation3], 1
    %11 = vsyncpa %s10, 0
    %12 = vsyncpa [#allocation6], 0
    %s13 = scalar_lea.sflag [#allocation6], 1
    %14 = vsyncpa %s13, 0
    %15 = vsyncpa [#allocation9], 0
    %16 = vsyncpa [#allocation4], 0
    %s17 = scalar_lea.sflag [#allocation4], 1
    %18 = vsyncpa %s17, 0
    loop: start=0, step=1, limit=4
    $region2: #{tpu_custom_call.1} parent=1 // loop_pre_header
      _
    $region3: #{tpu_custom_call.1} parent=1 // loop_header
      %s20 = sphi 0, %s24
      %p21 = scmp.ge.s32.totalorder %s20, 4
      %s27 = sphi 0, %s39
      %s28 = sphi 0, %s35
      %s29 = sphi 0, %s27
      %s30 = sphi 0, %s28
      %s31 = sphi 0, %s29
      %s32 = sphi 0, %s30
      %s44 = sphi 0, %s46
      %s47 = sphi 0, %s44
      %s48 = sphi 0, %s47
      %s64 = sphi 0, %s48
      %s74 = sphi 0, %s76
      %s77 = sphi 0, %s74
      %s78 = sphi 0, %s77
      %s94 = sphi 0, %s78
      %s98 = sphi 0, %s98
      %s100 = sphi 0, %s98
      %s101 = sphi 0, %s100
      %s115 = sphi 0, %s101
      %s119 = sphi 0, %s119
      %s121 = sphi 0, %s119
      %s122 = sphi 0, %s121
      %s136 = sphi 0, %s122
      %s144 = sphi 0, %s146
      %s147 = sphi 0, %s144
      %s148 = sphi 0, %s147
      %s164 = sphi 0, %s148
    $region4: #{tpu_custom_call.1} parent=1 // loop_header_branch
      %23 = sbr.rel (%p21) target = $region8
    $region5: #{tpu_custom_call.1} parent=1 // loop_body
      %s25 = ssub.s32 %s20, 1
      %s26 = ssub.s32 %s20, 2
      %s33 = sadd.s32 1, %s28
      %p34 = scmp.ge.s32.totalorder %s33, 1
      %s35 = scalar_select %p34, 0, %s33
      %s36 = sadd.s32 1, %s27
      %s37 = scalar_select %p34, %s36, %s27
      %p38 = scmp.ge.s32.totalorder %s37, 2
      %s39 = scalar_select %p38, 0, %s37
      %s40 = ssub.s32 %s27, %s39
      %s41 = ssub.s32 %s28, %s35
      %s42 = sor.u32 %s40, %s41
      %p43 = scmp.eq.s32.totalorder %s42, 0
      %s45 = sadd.s32 %s44, 1
      %s46 = scalar_select %p43, %s44, %s45
      %p49 = pneg %p43
      %p50 = scmp.eq.s32.totalorder %s20, 1
      %p51 = por %p49, %p50
      %p52 = scmp.ne.s32.totalorder %s44, %s47
      %p53 = scmp.eq.s32.totalorder %s20, 0
      %p54 = por %p52, %p53
      %p55 = scmp.ne.s32.totalorder %s44, %s47
      %p56 = scmp.eq.s32.totalorder %s25, 1
      %p57 = por %p55, %p56
      %p58 = scmp.ne.s32.totalorder %s47, %s48
      %p59 = scmp.eq.s32.totalorder %s25, 0
      %p60 = por %p58, %p59
      %p61 = scmp.ne.s32.totalorder %s47, %s48
      %p62 = scmp.eq.s32.totalorder %s26, 1
      %p63 = por %p61, %p62
      %p65 = scmp.ne.s32.totalorder %s48, %s64
      %p66 = scmp.eq.s32.totalorder %s26, 0
      %p67 = por %p65, %p66
      %s68 = sadd.s32 %s28, 1
      %s69 = sadd.s32 %s35, 1
      %s70 = ssub.s32 %s27, %s39
      %s71 = ssub.s32 %s68, %s69
      %s72 = sor.u32 %s70, %s71
      %p73 = scmp.eq.s32.totalorder %s72, 0
      %s75 = sadd.s32 %s74, 1
      %s76 = scalar_select %p73, %s74, %s75
      %p79 = pneg %p73
      %p80 = scmp.eq.s32.totalorder %s20, 1
      %p81 = por %p79, %p80
      %p82 = scmp.ne.s32.totalorder %s74, %s77
      %p83 = scmp.eq.s32.totalorder %s20, 0
      %p84 = por %p82, %p83
      %p85 = scmp.ne.s32.totalorder %s74, %s77
      %p86 = scmp.eq.s32.totalorder %s25, 1
      %p87 = por %p85, %p86
      %p88 = scmp.ne.s32.totalorder %s77, %s78
      %p89 = scmp.eq.s32.totalorder %s25, 0
      %p90 = por %p88, %p89
      %p91 = scmp.ne.s32.totalorder %s77, %s78
      %p92 = scmp.eq.s32.totalorder %s26, 1
      %p93 = por %p91, %p92
      %p95 = scmp.ne.s32.totalorder %s78, %s94
      %p96 = scmp.eq.s32.totalorder %s26, 0
      %p97 = por %p95, %p96
      %s99 = sadd.s32 %s98, 1
      %p102 = scmp.eq.s32.totalorder %s20, 1
      %p103 = scmp.ne.s32.totalorder %s98, %s100
      %p104 = scmp.eq.s32.totalorder %s20, 0
      %p105 = por %p103, %p104
      %p106 = scmp.ne.s32.totalorder %s98, %s100
      %p107 = scmp.eq.s32.totalorder %s25, 1
      %p108 = por %p106, %p107
      %p109 = scmp.ne.s32.totalorder %s100, %s101
      %p110 = scmp.eq.s32.totalorder %s25, 0
      %p111 = por %p109, %p110
      %p112 = scmp.ne.s32.totalorder %s100, %s101
      %p113 = scmp.eq.s32.totalorder %s26, 1
      %p114 = por %p112, %p113
      %p116 = scmp.ne.s32.totalorder %s101, %s115
      %p117 = scmp.eq.s32.totalorder %s26, 0
      %p118 = por %p116, %p117
      %s120 = sadd.s32 %s119, 1
      %p123 = scmp.eq.s32.totalorder %s20, 1
      %p124 = scmp.ne.s32.totalorder %s119, %s121
      %p125 = scmp.eq.s32.totalorder %s20, 0
      %p126 = por %p124, %p125
      %p127 = scmp.ne.s32.totalorder %s119, %s121
      %p128 = scmp.eq.s32.totalorder %s25, 1
      %p129 = por %p127, %p128
      %p130 = scmp.ne.s32.totalorder %s121, %s122
      %p131 = scmp.eq.s32.totalorder %s25, 0
      %p132 = por %p130, %p131
      %p133 = scmp.ne.s32.totalorder %s121, %s122
      %p134 = scmp.eq.s32.totalorder %s26, 1
      %p135 = por %p133, %p134
      %p137 = scmp.ne.s32.totalorder %s122, %s136
      %p138 = scmp.eq.s32.totalorder %s26, 0
      %p139 = por %p137, %p138
      %s140 = ssub.s32 %s27, %s39
      %s141 = ssub.s32 %s28, %s35
      %s142 = sor.u32 %s140, %s141
      %p143 = scmp.eq.s32.totalorder %s142, 0
      %s145 = sadd.s32 %s144, 1
      %s146 = scalar_select %p143, %s144, %s145
      %p149 = pneg %p143
      %p150 = scmp.eq.s32.totalorder %s20, 1
      %p151 = por %p149, %p150
      %p152 = scmp.ne.s32.totalorder %s144, %s147
      %p153 = scmp.eq.s32.totalorder %s20, 0
      %p154 = por %p152, %p153
      %p155 = scmp.ne.s32.totalorder %s144, %s147
      %p156 = scmp.eq.s32.totalorder %s25, 1
      %p157 = por %p155, %p156
      %p158 = scmp.ne.s32.totalorder %s147, %s148
      %p159 = scmp.eq.s32.totalorder %s25, 0
      %p160 = por %p158, %p159
      %p161 = scmp.ne.s32.totalorder %s147, %s148
      %p162 = scmp.eq.s32.totalorder %s26, 1
      %p163 = por %p161, %p162
      %p165 = scmp.ne.s32.totalorder %s148, %s164
      %p166 = scmp.eq.s32.totalorder %s26, 0
      %p167 = por %p165, %p166
      %p168 = scmp.le.s32.totalorder 1, %s20
      %p169 = scmp.lt.s32.totalorder %s20, 3
      %p170 = pnand %p168, %p169
      %p171 = pneg %p170
      // Predicated region
      $region9: #{tpu_custom_call.1} parent=5 // pred_check
        _
      $region10: #{tpu_custom_call.1} parent=5 // pred_check_branch
        %173 = sbr.rel (%p170) target = $region12
      $region11: #{tpu_custom_call.1} parent=5 // pred_region
        %s174 = ssub.s32 %s20, 1
        // Predicated region
        $region13: #{tpu_custom_call.1} parent=11 // pred_check
          %p175 = pneg %p111
        $region14: #{tpu_custom_call.1} parent=11 // pred_check_branch
          %177 = sbr.rel (%p175) target = $region16
        $region15: #{tpu_custom_call.1} parent=11 // pred_region
          %179 = vsyncadd [#allocation6], 0
          %s180 = sshll.u32 %s2, 4
          %s181 = int_to_ptr.hbm [resolvable:$true] %s180
          %s182 = sshll.u32 [#allocation7], 4
          %s183 = int_to_ptr.vmem [resolvable:$true] %s182
          %188 = dma.hbm_to_vmem [thread:$0]  %s181, 32768, %s183, [#allocation6], 1024, 1024, 64
        $region16: #{tpu_custom_call.1} parent=11 // pred_fallthru
          _
        // Predicated region
        $region17: #{tpu_custom_call.1} parent=11 // pred_check
          %p189 = pneg %p132
        $region18: #{tpu_custom_call.1} parent=11 // pred_check_branch
          %191 = sbr.rel (%p189) target = $region20
        $region19: #{tpu_custom_call.1} parent=11 // pred_region
          %193 = vsyncadd [#allocation9], 0
          %s195 = sshll.u32 %s3, 4
          %s196 = int_to_ptr.hbm [resolvable:$true] %s195
          %s197 = sshll.u32 [#allocation8], 4
          %s198 = int_to_ptr.vmem [resolvable:$true] %s197
          %200 = dma.hbm_to_vmem [thread:$0]  %s196, 128, %s198, [#allocation9]
        $region20: #{tpu_custom_call.1} parent=11 // pred_fallthru
          _
      $region12: #{tpu_custom_call.1} parent=5 // pred_fallthru
        _
      %p201 = scmp.lt.s32.totalorder %s20, 2
      // Predicated region
      $region21: #{tpu_custom_call.1} parent=5 // pred_check
        %p202 = pneg %p201
      $region22: #{tpu_custom_call.1} parent=5 // pred_check_branch
        %204 = sbr.rel (%p202) target = $region24
      $region23: #{tpu_custom_call.1} parent=5 // pred_region
        // Predicated region
        $region25: #{tpu_custom_call.1} parent=23 // pred_check
          %p205 = pneg %p54
        $region26: #{tpu_custom_call.1} parent=23 // pred_check_branch
          %207 = sbr.rel (%p205) target = $region28
        $region27: #{tpu_custom_call.1} parent=23 // pred_region
          %s208 = sand.u32 %s44, 1
          %s209 = scalar_lea.sflag [#allocation3], %s208
          %s210 = sand.u32 %s44, 1
          %s211 = smul.addr %s210, 8
          %s212 = scalar_lea.vmem [#allocation2], %s211
          %214 = vsyncadd %s209, 0
          %s215 = smul.addr %s27, 2
          %s216 = sadd.s32 %s28, %s215
          %s217 = smul.addr %s216, 8
          %s218 = scalar_lea.hbm %s0, %s217
          %s220 = sshll.u32 %s218, 4
          %s221 = int_to_ptr.hbm [resolvable:$true] %s220
          %s222 = sshll.u32 %s212, 4
          %s223 = int_to_ptr.vmem [resolvable:$true] %s222
          %225 = dma.hbm_to_vmem [thread:$0]  %s221, 128, %s223, %s209
        $region28: #{tpu_custom_call.1} parent=23 // pred_fallthru
          _
        // Predicated region
        $region29: #{tpu_custom_call.1} parent=23 // pred_check
          %p226 = pneg %p84
        $region30: #{tpu_custom_call.1} parent=23 // pred_check_branch
          %228 = sbr.rel (%p226) target = $region32
        $region31: #{tpu_custom_call.1} parent=23 // pred_region
          %s229 = sand.u32 %s20, 1
          %s230 = scalar_lea.sflag [#allocation6], %s229
          %s231 = sand.u32 %s74, 1
          %s232 = smul.addr %s231, 8
          %s233 = scalar_lea.vmem [#allocation5], %s232
          %s234 = sadd.s32 %s28, 1
          %236 = vsyncadd %s230, 0
          %s237 = smul.addr %s27, 2
          %s238 = sadd.s32 %s234, %s237
          %s239 = smul.addr %s238, 8
          %s240 = scalar_lea.hbm %s1, %s239
          %s242 = sshll.u32 %s240, 4
          %s243 = int_to_ptr.hbm [resolvable:$true] %s242
          %s244 = sshll.u32 %s233, 4
          %s245 = int_to_ptr.vmem [resolvable:$true] %s244
          %247 = dma.hbm_to_vmem [thread:$0]  %s243, 128, %s245, %s230
        $region32: #{tpu_custom_call.1} parent=23 // pred_fallthru
          _
      $region24: #{tpu_custom_call.1} parent=5 // pred_fallthru
        _
      %p248 = scmp.le.s32.totalorder 1, %s20
      %p249 = scmp.lt.s32.totalorder %s20, 3
      %p250 = pnand %p248, %p249
      %p251 = pneg %p250
      // Predicated region
      $region33: #{tpu_custom_call.1} parent=5 // pred_check
        _
      $region34: #{tpu_custom_call.1} parent=5 // pred_check_branch
        %253 = sbr.rel (%p250) target = $region36
      $region35: #{tpu_custom_call.1} parent=5 // pred_region
        %s254 = ssub.s32 %s20, 1
        %s255 = sand.u32 %s47, 1
        %s256 = scalar_lea.sflag [#allocation3], %s255
        %s257 = sand.u32 %s47, 1
        %s258 = smul.addr %s257, 8
        %s259 = scalar_lea.vmem [#allocation2], %s258
        // Predicated region
        $region37: #{tpu_custom_call.1} parent=35 // pred_check
          %p260 = pneg %p60
        $region38: #{tpu_custom_call.1} parent=35 // pred_check_branch
          %262 = sbr.rel (%p260) target = $region40
        $region39: #{tpu_custom_call.1} parent=35 // pred_region
          %264 = dma.done %s256, 128
        $region40: #{tpu_custom_call.1} parent=35 // pred_fallthru
          _
        %s265 = sand.u32 %s25, 1
        %s266 = scalar_lea.sflag [#allocation6], %s265
        %s267 = sand.u32 %s77, 1
        %s268 = smul.addr %s267, 8
        %s269 = scalar_lea.vmem [#allocation5], %s268
        // Predicated region
        $region41: #{tpu_custom_call.1} parent=35 // pred_check
          %p270 = pneg %p90
        $region42: #{tpu_custom_call.1} parent=35 // pred_check_branch
          %272 = sbr.rel (%p270) target = $region44
        $region43: #{tpu_custom_call.1} parent=35 // pred_region
          %274 = dma.done %s266, 128
        $region44: #{tpu_custom_call.1} parent=35 // pred_fallthru
          _
        // Predicated region
        $region45: #{tpu_custom_call.1} parent=35 // pred_check
          %p275 = pneg %p111
        $region46: #{tpu_custom_call.1} parent=35 // pred_check_branch
          %277 = sbr.rel (%p275) target = $region48
        $region47: #{tpu_custom_call.1} parent=35 // pred_region
          %279 = dma.done [#allocation6], 32768
        $region48: #{tpu_custom_call.1} parent=35 // pred_fallthru
          _
        // Predicated region
        $region49: #{tpu_custom_call.1} parent=35 // pred_check
          %p280 = pneg %p132
        $region50: #{tpu_custom_call.1} parent=35 // pred_check_branch
          %282 = sbr.rel (%p280) target = $region52
        $region51: #{tpu_custom_call.1} parent=35 // pred_region
          %284 = dma.done [#allocation9], 128
        $region52: #{tpu_custom_call.1} parent=35 // pred_fallthru
          _
        %s285 = sand.u32 %s47, 1
        %s286 = scalar_lea.sflag [#allocation3], %s285
        %s287 = sand.u32 %s47, 1
        %s288 = smul.addr %s287, 8
        %s289 = scalar_lea.vmem [#allocation2], %s288
        %p290 = pneg %p60
        %p291 = pneg %p57
        %s292 = sand.u32 %s25, 1
        %s293 = scalar_lea.sflag [#allocation6], %s292
        %s294 = sand.u32 %s77, 1
        %s295 = smul.addr %s294, 8
        %s296 = scalar_lea.vmem [#allocation5], %s295
        %p297 = pneg %p90
        %p298 = pneg %p87
        %p299 = pneg %p111
        %p300 = pneg %p108
        %p301 = pneg %p132
        %p302 = pneg %p129
        %p303 = pneg %p160
        %p304 = pneg %p157
        %s305 = sand.u32 %s147, 1
        %s306 = scalar_lea.sflag [#allocation4], %s305
        %s307 = sand.u32 %s147, 1
        %s308 = smul.addr %s307, 64
        %s309 = scalar_lea.vmem [#allocation10], %s308
        %s310 = sadd.s32 %s30, 1
        %v311 = vld [vmem:[%s259] sm:$0xff]
        %v312 = vld [vmem:[%s269] sm:$0x1]
        %v314 = vrot.slane %v311, 1
        %v317 = vrot.slane %v312, 1
        %vm319 = vcmask 1046528
        %v320 = vsel %vm319, %v314, %v317
        %v321 = vld [vmem:[#allocation7] sm:$0xff]
        %v322 = vld [vmem:[#allocation7 + $0x8] sm:$0xff]
        %v323 = vld [vmem:[#allocation7 + $0x10] sm:$0xff]
        %v324 = vld [vmem:[#allocation7 + $0x18] sm:$0xff]
        %v325 = vld [vmem:[#allocation7 + $0x20] sm:$0xff]
        %v326 = vld [vmem:[#allocation7 + $0x28] sm:$0xff]
        %v327 = vld [vmem:[#allocation7 + $0x30] sm:$0xff]
        %v328 = vld [vmem:[#allocation7 + $0x38] sm:$0xff]
        %v329 = vld [vmem:[#allocation7 + $0x40] sm:$0xff]
        %v330 = vld [vmem:[#allocation7 + $0x48] sm:$0xff]
        %v331 = vld [vmem:[#allocation7 + $0x50] sm:$0xff]
        %v332 = vld [vmem:[#allocation7 + $0x58] sm:$0xff]
        %v333 = vld [vmem:[#allocation7 + $0x60] sm:$0xff]
        %v334 = vld [vmem:[#allocation7 + $0x68] sm:$0xff]
        %v335 = vld [vmem:[#allocation7 + $0x70] sm:$0xff]
        %v336 = vld [vmem:[#allocation7 + $0x78] sm:$0xff]
        %v337 = vld [vmem:[#allocation7 + $0x80] sm:$0xff]
        %v338 = vld [vmem:[#allocation7 + $0x88] sm:$0xff]
        %v339 = vld [vmem:[#allocation7 + $0x90] sm:$0xff]
        %v340 = vld [vmem:[#allocation7 + $0x98] sm:$0xff]
        %v341 = vld [vmem:[#allocation7 + $0xa0] sm:$0xff]
        %v342 = vld [vmem:[#allocation7 + $0xa8] sm:$0xff]
        %v343 = vld [vmem:[#allocation7 + $0xb0] sm:$0xff]
        %v344 = vld [vmem:[#allocation7 + $0xb8] sm:$0xff]
        %v345 = vld [vmem:[#allocation7 + $0xc0] sm:$0xff]
        %v346 = vld [vmem:[#allocation7 + $0xc8] sm:$0xff]
        %v347 = vld [vmem:[#allocation7 + $0xd0] sm:$0xff]
        %v348 = vld [vmem:[#allocation7 + $0xd8] sm:$0xff]
        %v349 = vld [vmem:[#allocation7 + $0xe0] sm:$0xff]
        %v350 = vld [vmem:[#allocation7 + $0xe8] sm:$0xff]
        %v351 = vld [vmem:[#allocation7 + $0xf0] sm:$0xff]
        %v352 = vld [vmem:[#allocation7 + $0xf8] sm:$0xff]
        %v353 = vld [vmem:[#allocation7 + $0x100] sm:$0xff]
        %v354 = vld [vmem:[#allocation7 + $0x108] sm:$0xff]
        %v355 = vld [vmem:[#allocation7 + $0x110] sm:$0xff]
        %v356 = vld [vmem:[#allocation7 + $0x118] sm:$0xff]
        %v357 = vld [vmem:[#allocation7 + $0x120] sm:$0xff]
        %v358 = vld [vmem:[#allocation7 + $0x128] sm:$0xff]
        %v359 = vld [vmem:[#allocation7 + $0x130] sm:$0xff]
        %v360 = vld [vmem:[#allocation7 + $0x138] sm:$0xff]
        %v361 = vld [vmem:[#allocation7 + $0x140] sm:$0xff]
        %v362 = vld [vmem:[#allocation7 + $0x148] sm:$0xff]
        %v363 = vld [vmem:[#allocation7 + $0x150] sm:$0xff]
        %v364 = vld [vmem:[#allocation7 + $0x158] sm:$0xff]
        %v365 = vld [vmem:[#allocation7 + $0x160] sm:$0xff]
        %v366 = vld [vmem:[#allocation7 + $0x168] sm:$0xff]
        %v367 = vld [vmem:[#allocation7 + $0x170] sm:$0xff]
        %v368 = vld [vmem:[#allocation7 + $0x178] sm:$0xff]
        %v369 = vld [vmem:[#allocation7 + $0x180] sm:$0xff]
        %v370 = vld [vmem:[#allocation7 + $0x188] sm:$0xff]
        %v371 = vld [vmem:[#allocation7 + $0x190] sm:$0xff]
        %v372 = vld [vmem:[#allocation7 + $0x198] sm:$0xff]
        %v373 = vld [vmem:[#allocation7 + $0x1a0] sm:$0xff]
        %v374 = vld [vmem:[#allocation7 + $0x1a8] sm:$0xff]
        %v375 = vld [vmem:[#allocation7 + $0x1b0] sm:$0xff]
        %v376 = vld [vmem:[#allocation7 + $0x1b8] sm:$0xff]
        %v377 = vld [vmem:[#allocation7 + $0x1c0] sm:$0xff]
        %v378 = vld [vmem:[#allocation7 + $0x1c8] sm:$0xff]
        %v379 = vld [vmem:[#allocation7 + $0x1d0] sm:$0xff]
        %v380 = vld [vmem:[#allocation7 + $0x1d8] sm:$0xff]
        %v381 = vld [vmem:[#allocation7 + $0x1e0] sm:$0xff]
        %v382 = vld [vmem:[#allocation7 + $0x1e8] sm:$0xff]
        %v383 = vld [vmem:[#allocation7 + $0x1f0] sm:$0xff]
        %v384 = vld [vmem:[#allocation7 + $0x1f8] sm:$0xff]
        %v385 = vld [vmem:[#allocation7 + $0x200] sm:$0xff]
        %v386 = vld [vmem:[#allocation7 + $0x208] sm:$0xff]
        %v387 = vld [vmem:[#allocation7 + $0x210] sm:$0xff]
        %v388 = vld [vmem:[#allocation7 + $0x218] sm:$0xff]
        %v389 = vld [vmem:[#allocation7 + $0x220] sm:$0xff]
        %v390 = vld [vmem:[#allocation7 + $0x228] sm:$0xff]
        %v391 = vld [vmem:[#allocation7 + $0x230] sm:$0xff]
        %v392 = vld [vmem:[#allocation7 + $0x238] sm:$0xff]
        %v393 = vld [vmem:[#allocation7 + $0x240] sm:$0xff]
        %v394 = vld [vmem:[#allocation7 + $0x248] sm:$0xff]
        %v395 = vld [vmem:[#allocation7 + $0x250] sm:$0xff]
        %v396 = vld [vmem:[#allocation7 + $0x258] sm:$0xff]
        %v397 = vld [vmem:[#allocation7 + $0x260] sm:$0xff]
        %v398 = vld [vmem:[#allocation7 + $0x268] sm:$0xff]
        %v399 = vld [vmem:[#allocation7 + $0x270] sm:$0xff]
        %v400 = vld [vmem:[#allocation7 + $0x278] sm:$0xff]
        %v401 = vld [vmem:[#allocation7 + $0x280] sm:$0xff]
        %v402 = vld [vmem:[#allocation7 + $0x288] sm:$0xff]
        %v403 = vld [vmem:[#allocation7 + $0x290] sm:$0xff]
        %v404 = vld [vmem:[#allocation7 + $0x298] sm:$0xff]
        %v405 = vld [vmem:[#allocation7 + $0x2a0] sm:$0xff]
        %v406 = vld [vmem:[#allocation7 + $0x2a8] sm:$0xff]
        %v407 = vld [vmem:[#allocation7 + $0x2b0] sm:$0xff]
        %v408 = vld [vmem:[#allocation7 + $0x2b8] sm:$0xff]
        %v409 = vld [vmem:[#allocation7 + $0x2c0] sm:$0xff]
        %v410 = vld [vmem:[#allocation7 + $0x2c8] sm:$0xff]
        %v411 = vld [vmem:[#allocation7 + $0x2d0] sm:$0xff]
        %v412 = vld [vmem:[#allocation7 + $0x2d8] sm:$0xff]
        %v413 = vld [vmem:[#allocation7 + $0x2e0] sm:$0xff]
        %v414 = vld [vmem:[#allocation7 + $0x2e8] sm:$0xff]
        %v415 = vld [vmem:[#allocation7 + $0x2f0] sm:$0xff]
        %v416 = vld [vmem:[#allocation7 + $0x2f8] sm:$0xff]
        %v417 = vld [vmem:[#allocation7 + $0x300] sm:$0xff]
        %v418 = vld [vmem:[#allocation7 + $0x308] sm:$0xff]
        %v419 = vld [vmem:[#allocation7 + $0x310] sm:$0xff]
        %v420 = vld [vmem:[#allocation7 + $0x318] sm:$0xff]
        %v421 = vld [vmem:[#allocation7 + $0x320] sm:$0xff]
        %v422 = vld [vmem:[#allocation7 + $0x328] sm:$0xff]
        %v423 = vld [vmem:[#allocation7 + $0x330] sm:$0xff]
        %v424 = vld [vmem:[#allocation7 + $0x338] sm:$0xff]
        %v425 = vld [vmem:[#allocation7 + $0x340] sm:$0xff]
        %v426 = vld [vmem:[#allocation7 + $0x348] sm:$0xff]
        %v427 = vld [vmem:[#allocation7 + $0x350] sm:$0xff]
        %v428 = vld [vmem:[#allocation7 + $0x358] sm:$0xff]
        %v429 = vld [vmem:[#allocation7 + $0x360] sm:$0xff]
        %v430 = vld [vmem:[#allocation7 + $0x368] sm:$0xff]
        %v431 = vld [vmem:[#allocation7 + $0x370] sm:$0xff]
        %v432 = vld [vmem:[#allocation7 + $0x378] sm:$0xff]
        %v433 = vld [vmem:[#allocation7 + $0x380] sm:$0xff]
        %v434 = vld [vmem:[#allocation7 + $0x388] sm:$0xff]
        %v435 = vld [vmem:[#allocation7 + $0x390] sm:$0xff]
        %v436 = vld [vmem:[#allocation7 + $0x398] sm:$0xff]
        %v437 = vld [vmem:[#allocation7 + $0x3a0] sm:$0xff]
        %v438 = vld [vmem:[#allocation7 + $0x3a8] sm:$0xff]
        %v439 = vld [vmem:[#allocation7 + $0x3b0] sm:$0xff]
        %v440 = vld [vmem:[#allocation7 + $0x3b8] sm:$0xff]
        %v441 = vld [vmem:[#allocation7 + $0x3c0] sm:$0xff]
        %v442 = vld [vmem:[#allocation7 + $0x3c8] sm:$0xff]
        %v443 = vld [vmem:[#allocation7 + $0x3d0] sm:$0xff]
        %v444 = vld [vmem:[#allocation7 + $0x3d8] sm:$0xff]
        %v445 = vld [vmem:[#allocation7 + $0x3e0] sm:$0xff]
        %v446 = vld [vmem:[#allocation7 + $0x3e8] sm:$0xff]
        %v447 = vld [vmem:[#allocation7 + $0x3f0] sm:$0xff]
        %v448 = vld [vmem:[#allocation7 + $0x3f8] sm:$0xff]
        %v449 = vld [vmem:[#allocation7 + $0x400] sm:$0xff]
        %v450 = vld [vmem:[#allocation7 + $0x408] sm:$0xff]
        %v451 = vld [vmem:[#allocation7 + $0x410] sm:$0xff]
        %v452 = vld [vmem:[#allocation7 + $0x418] sm:$0xff]
        %v453 = vld [vmem:[#allocation7 + $0x420] sm:$0xff]
        %v454 = vld [vmem:[#allocation7 + $0x428] sm:$0xff]
        %v455 = vld [vmem:[#allocation7 + $0x430] sm:$0xff]
        %v456 = vld [vmem:[#allocation7 + $0x438] sm:$0xff]
        %v457 = vld [vmem:[#allocation7 + $0x440] sm:$0xff]
        %v458 = vld [vmem:[#allocation7 + $0x448] sm:$0xff]
        %v459 = vld [vmem:[#allocation7 + $0x450] sm:$0xff]
        %v460 = vld [vmem:[#allocation7 + $0x458] sm:$0xff]
        %v461 = vld [vmem:[#allocation7 + $0x460] sm:$0xff]
        %v462 = vld [vmem:[#allocation7 + $0x468] sm:$0xff]
        %v463 = vld [vmem:[#allocation7 + $0x470] sm:$0xff]
        %v464 = vld [vmem:[#allocation7 + $0x478] sm:$0xff]
        %v465 = vld [vmem:[#allocation7 + $0x480] sm:$0xff]
        %v466 = vld [vmem:[#allocation7 + $0x488] sm:$0xff]
        %v467 = vld [vmem:[#allocation7 + $0x490] sm:$0xff]
        %v468 = vld [vmem:[#allocation7 + $0x498] sm:$0xff]
        %v469 = vld [vmem:[#allocation7 + $0x4a0] sm:$0xff]
        %v470 = vld [vmem:[#allocation7 + $0x4a8] sm:$0xff]
        %v471 = vld [vmem:[#allocation7 + $0x4b0] sm:$0xff]
        %v472 = vld [vmem:[#allocation7 + $0x4b8] sm:$0xff]
        %v473 = vld [vmem:[#allocation7 + $0x4c0] sm:$0xff]
        %v474 = vld [vmem:[#allocation7 + $0x4c8] sm:$0xff]
        %v475 = vld [vmem:[#allocation7 + $0x4d0] sm:$0xff]
        %v476 = vld [vmem:[#allocation7 + $0x4d8] sm:$0xff]
        %v477 = vld [vmem:[#allocation7 + $0x4e0] sm:$0xff]
        %v478 = vld [vmem:[#allocation7 + $0x4e8] sm:$0xff]
        %v479 = vld [vmem:[#allocation7 + $0x4f0] sm:$0xff]
        %v480 = vld [vmem:[#allocation7 + $0x4f8] sm:$0xff]
        %v481 = vld [vmem:[#allocation7 + $0x500] sm:$0xff]
        %v482 = vld [vmem:[#allocation7 + $0x508] sm:$0xff]
        %v483 = vld [vmem:[#allocation7 + $0x510] sm:$0xff]
        %v484 = vld [vmem:[#allocation7 + $0x518] sm:$0xff]
        %v485 = vld [vmem:[#allocation7 + $0x520] sm:$0xff]
        %v486 = vld [vmem:[#allocation7 + $0x528] sm:$0xff]
        %v487 = vld [vmem:[#allocation7 + $0x530] sm:$0xff]
        %v488 = vld [vmem:[#allocation7 + $0x538] sm:$0xff]
        %v489 = vld [vmem:[#allocation7 + $0x540] sm:$0xff]
        %v490 = vld [vmem:[#allocation7 + $0x548] sm:$0xff]
        %v491 = vld [vmem:[#allocation7 + $0x550] sm:$0xff]
        %v492 = vld [vmem:[#allocation7 + $0x558] sm:$0xff]
        %v493 = vld [vmem:[#allocation7 + $0x560] sm:$0xff]
        %v494 = vld [vmem:[#allocation7 + $0x568] sm:$0xff]
        %v495 = vld [vmem:[#allocation7 + $0x570] sm:$0xff]
        %v496 = vld [vmem:[#allocation7 + $0x578] sm:$0xff]
        %v497 = vld [vmem:[#allocation7 + $0x580] sm:$0xff]
        %v498 = vld [vmem:[#allocation7 + $0x588] sm:$0xff]
        %v499 = vld [vmem:[#allocation7 + $0x590] sm:$0xff]
        %v500 = vld [vmem:[#allocation7 + $0x598] sm:$0xff]
        %v501 = vld [vmem:[#allocation7 + $0x5a0] sm:$0xff]
        %v502 = vld [vmem:[#allocation7 + $0x5a8] sm:$0xff]
        %v503 = vld [vmem:[#allocation7 + $0x5b0] sm:$0xff]
        %v504 = vld [vmem:[#allocation7 + $0x5b8] sm:$0xff]
        %v505 = vld [vmem:[#allocation7 + $0x5c0] sm:$0xff]
        %v506 = vld [vmem:[#allocation7 + $0x5c8] sm:$0xff]
        %v507 = vld [vmem:[#allocation7 + $0x5d0] sm:$0xff]
        %v508 = vld [vmem:[#allocation7 + $0x5d8] sm:$0xff]
        %v509 = vld [vmem:[#allocation7 + $0x5e0] sm:$0xff]
        %v510 = vld [vmem:[#allocation7 + $0x5e8] sm:$0xff]
        %v511 = vld [vmem:[#allocation7 + $0x5f0] sm:$0xff]
        %v512 = vld [vmem:[#allocation7 + $0x5f8] sm:$0xff]
        %v513 = vld [vmem:[#allocation7 + $0x600] sm:$0xff]
        %v514 = vld [vmem:[#allocation7 + $0x608] sm:$0xff]
        %v515 = vld [vmem:[#allocation7 + $0x610] sm:$0xff]
        %v516 = vld [vmem:[#allocation7 + $0x618] sm:$0xff]
        %v517 = vld [vmem:[#allocation7 + $0x620] sm:$0xff]
        %v518 = vld [vmem:[#allocation7 + $0x628] sm:$0xff]
        %v519 = vld [vmem:[#allocation7 + $0x630] sm:$0xff]
        %v520 = vld [vmem:[#allocation7 + $0x638] sm:$0xff]
        %v521 = vld [vmem:[#allocation7 + $0x640] sm:$0xff]
        %v522 = vld [vmem:[#allocation7 + $0x648] sm:$0xff]
        %v523 = vld [vmem:[#allocation7 + $0x650] sm:$0xff]
        %v524 = vld [vmem:[#allocation7 + $0x658] sm:$0xff]
        %v525 = vld [vmem:[#allocation7 + $0x660] sm:$0xff]
        %v526 = vld [vmem:[#allocation7 + $0x668] sm:$0xff]
        %v527 = vld [vmem:[#allocation7 + $0x670] sm:$0xff]
        %v528 = vld [vmem:[#allocation7 + $0x678] sm:$0xff]
        %v529 = vld [vmem:[#allocation7 + $0x680] sm:$0xff]
        %v530 = vld [vmem:[#allocation7 + $0x688] sm:$0xff]
        %v531 = vld [vmem:[#allocation7 + $0x690] sm:$0xff]
        %v532 = vld [vmem:[#allocation7 + $0x698] sm:$0xff]
        %v533 = vld [vmem:[#allocation7 + $0x6a0] sm:$0xff]
        %v534 = vld [vmem:[#allocation7 + $0x6a8] sm:$0xff]
        %v535 = vld [vmem:[#allocation7 + $0x6b0] sm:$0xff]
        %v536 = vld [vmem:[#allocation7 + $0x6b8] sm:$0xff]
        %v537 = vld [vmem:[#allocation7 + $0x6c0] sm:$0xff]
        %v538 = vld [vmem:[#allocation7 + $0x6c8] sm:$0xff]
        %v539 = vld [vmem:[#allocation7 + $0x6d0] sm:$0xff]
        %v540 = vld [vmem:[#allocation7 + $0x6d8] sm:$0xff]
        %v541 = vld [vmem:[#allocation7 + $0x6e0] sm:$0xff]
        %v542 = vld [vmem:[#allocation7 + $0x6e8] sm:$0xff]
        %v543 = vld [vmem:[#allocation7 + $0x6f0] sm:$0xff]
        %v544 = vld [vmem:[#allocation7 + $0x6f8] sm:$0xff]
        %v545 = vld [vmem:[#allocation7 + $0x700] sm:$0xff]
        %v546 = vld [vmem:[#allocation7 + $0x708] sm:$0xff]
        %v547 = vld [vmem:[#allocation7 + $0x710] sm:$0xff]
        %v548 = vld [vmem:[#allocation7 + $0x718] sm:$0xff]
        %v549 = vld [vmem:[#allocation7 + $0x720] sm:$0xff]
        %v550 = vld [vmem:[#allocation7 + $0x728] sm:$0xff]
        %v551 = vld [vmem:[#allocation7 + $0x730] sm:$0xff]
        %v552 = vld [vmem:[#allocation7 + $0x738] sm:$0xff]
        %v553 = vld [vmem:[#allocation7 + $0x740] sm:$0xff]
        %v554 = vld [vmem:[#allocation7 + $0x748] sm:$0xff]
        %v555 = vld [vmem:[#allocation7 + $0x750] sm:$0xff]
        %v556 = vld [vmem:[#allocation7 + $0x758] sm:$0xff]
        %v557 = vld [vmem:[#allocation7 + $0x760] sm:$0xff]
        %v558 = vld [vmem:[#allocation7 + $0x768] sm:$0xff]
        %v559 = vld [vmem:[#allocation7 + $0x770] sm:$0xff]
        %v560 = vld [vmem:[#allocation7 + $0x778] sm:$0xff]
        %v561 = vld [vmem:[#allocation7 + $0x780] sm:$0xff]
        %v562 = vld [vmem:[#allocation7 + $0x788] sm:$0xff]
        %v563 = vld [vmem:[#allocation7 + $0x790] sm:$0xff]
        %v564 = vld [vmem:[#allocation7 + $0x798] sm:$0xff]
        %v565 = vld [vmem:[#allocation7 + $0x7a0] sm:$0xff]
        %v566 = vld [vmem:[#allocation7 + $0x7a8] sm:$0xff]
        %v567 = vld [vmem:[#allocation7 + $0x7b0] sm:$0xff]
        %v568 = vld [vmem:[#allocation7 + $0x7b8] sm:$0xff]
        %v569 = vld [vmem:[#allocation7 + $0x7c0] sm:$0xff]
        %v570 = vld [vmem:[#allocation7 + $0x7c8] sm:$0xff]
        %v571 = vld [vmem:[#allocation7 + $0x7d0] sm:$0xff]
        %v572 = vld [vmem:[#allocation7 + $0x7d8] sm:$0xff]
        %v573 = vld [vmem:[#allocation7 + $0x7e0] sm:$0xff]
        %v574 = vld [vmem:[#allocation7 + $0x7e8] sm:$0xff]
        %v575 = vld [vmem:[#allocation7 + $0x7f0] sm:$0xff]
        %v576 = vld [vmem:[#allocation7 + $0x7f8] sm:$0xff]
        %v577 = vld [vmem:[#allocation8] sm:$0xff]
        %v579 = vperm.slane %v577, 0
        %v580 = vperm.slane %v577, 1
        %v581 = vperm.slane %v577, 2
        %v582 = vperm.slane %v577, 3
        %v583 = vperm.slane %v577, 4
        %v584 = vperm.slane %v577, 5
        %v585 = vperm.slane %v577, 6
        %v586 = vperm.slane %v577, 7
        %595 = vmatpush.msra.mxu0 %v441
        %596 = vmatpush.msra.mxu0 %v433
        %597 = vmatpush.msra.mxu0 %v425
        %598 = vmatpush.msra.mxu0 %v417
        %599 = vmatpush.msra.mxu0 %v409
        %600 = vmatpush.msra.mxu0 %v401
        %601 = vmatpush.msra.mxu0 %v393
        %602 = vmatpush.msra.mxu0 %v385
        %603 = vmatpush.msra.mxu0 %v377
        %604 = vmatpush.msra.mxu0 %v369
        %605 = vmatpush.msra.mxu0 %v361
        %606 = vmatpush.msra.mxu0 %v353
        %607 = vmatpush.msra.mxu0 %v345
        %608 = vmatpush.msra.mxu0 %v337
        %609 = vmatpush.msra.mxu0 %v329
        %610 = vmatpush.msra.mxu0 %v321
        %611 = vmatmul.f32.gmra.mxu0 %v311
        %v612 = vpop.f32.mrf.mxu0
        %v613 = vadd.f32 %v579, %v612
        %614 = vdwg.mxu0
        %615 = vmatpush.msra.mxu0 %v569
        %616 = vmatpush.msra.mxu0 %v561
        %617 = vmatpush.msra.mxu0 %v553
        %618 = vmatpush.msra.mxu0 %v545
        %619 = vmatpush.msra.mxu0 %v537
        %620 = vmatpush.msra.mxu0 %v529
        %621 = vmatpush.msra.mxu0 %v521
        %622 = vmatpush.msra.mxu0 %v513
        %623 = vmatpush.msra.mxu0 %v505
        %624 = vmatpush.msra.mxu0 %v497
        %625 = vmatpush.msra.mxu0 %v489
        %626 = vmatpush.msra.mxu0 %v481
        %627 = vmatpush.msra.mxu0 %v473
        %628 = vmatpush.msra.mxu0 %v465
        %629 = vmatpush.msra.mxu0 %v457
        %630 = vmatpush.msra.mxu0 %v449
        %631 = vmatmul.f32.gmra.mxu0 %v320
        %v632 = vpop.f32.mrf.mxu0
        %v633 = vadd.f32 %v613, %v632
        %634 = vdwg.mxu0
        %635 = vmatpush.msra.mxu0 %v442
        %636 = vmatpush.msra.mxu0 %v434
        %637 = vmatpush.msra.mxu0 %v426
        %638 = vmatpush.msra.mxu0 %v418
        %639 = vmatpush.msra.mxu0 %v410
        %640 = vmatpush.msra.mxu0 %v402
        %641 = vmatpush.msra.mxu0 %v394
        %642 = vmatpush.msra.mxu0 %v386
        %643 = vmatpush.msra.mxu0 %v378
        %644 = vmatpush.msra.mxu0 %v370
        %645 = vmatpush.msra.mxu0 %v362
        %646 = vmatpush.msra.mxu0 %v354
        %647 = vmatpush.msra.mxu0 %v346
        %648 = vmatpush.msra.mxu0 %v338
        %649 = vmatpush.msra.mxu0 %v330
        %650 = vmatpush.msra.mxu0 %v322
        %651 = vmatmul.f32.gmra.mxu0 %v311
        %v652 = vpop.f32.mrf.mxu0
        %v653 = vadd.f32 %v580, %v652
        %654 = vdwg.mxu0
        %655 = vmatpush.msra.mxu0 %v570
        %656 = vmatpush.msra.mxu0 %v562
        %657 = vmatpush.msra.mxu0 %v554
        %658 = vmatpush.msra.mxu0 %v546
        %659 = vmatpush.msra.mxu0 %v538
        %660 = vmatpush.msra.mxu0 %v530
        %661 = vmatpush.msra.mxu0 %v522
        %662 = vmatpush.msra.mxu0 %v514
        %663 = vmatpush.msra.mxu0 %v506
        %664 = vmatpush.msra.mxu0 %v498
        %665 = vmatpush.msra.mxu0 %v490
        %666 = vmatpush.msra.mxu0 %v482
        %667 = vmatpush.msra.mxu0 %v474
        %668 = vmatpush.msra.mxu0 %v466
        %669 = vmatpush.msra.mxu0 %v458
        %670 = vmatpush.msra.mxu0 %v450
        %671 = vmatmul.f32.gmra.mxu0 %v320
        %v672 = vpop.f32.mrf.mxu0
        %v673 = vadd.f32 %v653, %v672
        %674 = vdwg.mxu0
        %675 = vmatpush.msra.mxu0 %v443
        %676 = vmatpush.msra.mxu0 %v435
        %677 = vmatpush.msra.mxu0 %v427
        %678 = vmatpush.msra.mxu0 %v419
        %679 = vmatpush.msra.mxu0 %v411
        %680 = vmatpush.msra.mxu0 %v403
        %681 = vmatpush.msra.mxu0 %v395
        %682 = vmatpush.msra.mxu0 %v387
        %683 = vmatpush.msra.mxu0 %v379
        %684 = vmatpush.msra.mxu0 %v371
        %685 = vmatpush.msra.mxu0 %v363
        %686 = vmatpush.msra.mxu0 %v355
        %687 = vmatpush.msra.mxu0 %v347
        %688 = vmatpush.msra.mxu0 %v339
        %689 = vmatpush.msra.mxu0 %v331
        %690 = vmatpush.msra.mxu0 %v323
        %691 = vmatmul.f32.gmra.mxu0 %v311
        %v692 = vpop.f32.mrf.mxu0
        %v693 = vadd.f32 %v581, %v692
        %694 = vdwg.mxu0
        %695 = vmatpush.msra.mxu0 %v571
        %696 = vmatpush.msra.mxu0 %v563
        %697 = vmatpush.msra.mxu0 %v555
        %698 = vmatpush.msra.mxu0 %v547
        %699 = vmatpush.msra.mxu0 %v539
        %700 = vmatpush.msra.mxu0 %v531
        %701 = vmatpush.msra.mxu0 %v523
        %702 = vmatpush.msra.mxu0 %v515
        %703 = vmatpush.msra.mxu0 %v507
        %704 = vmatpush.msra.mxu0 %v499
        %705 = vmatpush.msra.mxu0 %v491
        %706 = vmatpush.msra.mxu0 %v483
        %707 = vmatpush.msra.mxu0 %v475
        %708 = vmatpush.msra.mxu0 %v467
        %709 = vmatpush.msra.mxu0 %v459
        %710 = vmatpush.msra.mxu0 %v451
        %711 = vmatmul.f32.gmra.mxu0 %v320
        %v712 = vpop.f32.mrf.mxu0
        %v713 = vadd.f32 %v693, %v712
        %714 = vdwg.mxu0
        %715 = vmatpush.msra.mxu0 %v444
        %716 = vmatpush.msra.mxu0 %v436
        %717 = vmatpush.msra.mxu0 %v428
        %718 = vmatpush.msra.mxu0 %v420
        %719 = vmatpush.msra.mxu0 %v412
        %720 = vmatpush.msra.mxu0 %v404
        %721 = vmatpush.msra.mxu0 %v396
        %722 = vmatpush.msra.mxu0 %v388
        %723 = vmatpush.msra.mxu0 %v380
        %724 = vmatpush.msra.mxu0 %v372
        %725 = vmatpush.msra.mxu0 %v364
        %726 = vmatpush.msra.mxu0 %v356
        %727 = vmatpush.msra.mxu0 %v348
        %728 = vmatpush.msra.mxu0 %v340
        %729 = vmatpush.msra.mxu0 %v332
        %730 = vmatpush.msra.mxu0 %v324
        %731 = vmatmul.f32.gmra.mxu0 %v311
        %v732 = vpop.f32.mrf.mxu0
        %v733 = vadd.f32 %v582, %v732
        %734 = vdwg.mxu0
        %735 = vmatpush.msra.mxu0 %v572
        %736 = vmatpush.msra.mxu0 %v564
        %737 = vmatpush.msra.mxu0 %v556
        %738 = vmatpush.msra.mxu0 %v548
        %739 = vmatpush.msra.mxu0 %v540
        %740 = vmatpush.msra.mxu0 %v532
        %741 = vmatpush.msra.mxu0 %v524
        %742 = vmatpush.msra.mxu0 %v516
        %743 = vmatpush.msra.mxu0 %v508
        %744 = vmatpush.msra.mxu0 %v500
        %745 = vmatpush.msra.mxu0 %v492
        %746 = vmatpush.msra.mxu0 %v484
        %747 = vmatpush.msra.mxu0 %v476
        %748 = vmatpush.msra.mxu0 %v468
        %749 = vmatpush.msra.mxu0 %v460
        %750 = vmatpush.msra.mxu0 %v452
        %751 = vmatmul.f32.gmra.mxu0 %v320
        %v752 = vpop.f32.mrf.mxu0
        %v753 = vadd.f32 %v733, %v752
        %754 = vdwg.mxu0
        %755 = vmatpush.msra.mxu0 %v445
        %756 = vmatpush.msra.mxu0 %v437
        %757 = vmatpush.msra.mxu0 %v429
        %758 = vmatpush.msra.mxu0 %v421
        %759 = vmatpush.msra.mxu0 %v413
        %760 = vmatpush.msra.mxu0 %v405
        %761 = vmatpush.msra.mxu0 %v397
        %762 = vmatpush.msra.mxu0 %v389
        %763 = vmatpush.msra.mxu0 %v381
        %764 = vmatpush.msra.mxu0 %v373
        %765 = vmatpush.msra.mxu0 %v365
        %766 = vmatpush.msra.mxu0 %v357
        %767 = vmatpush.msra.mxu0 %v349
        %768 = vmatpush.msra.mxu0 %v341
        %769 = vmatpush.msra.mxu0 %v333
        %770 = vmatpush.msra.mxu0 %v325
        %771 = vmatmul.f32.gmra.mxu0 %v311
        %v772 = vpop.f32.mrf.mxu0
        %v773 = vadd.f32 %v583, %v772
        %774 = vdwg.mxu0
        %775 = vmatpush.msra.mxu0 %v573
        %776 = vmatpush.msra.mxu0 %v565
        %777 = vmatpush.msra.mxu0 %v557
        %778 = vmatpush.msra.mxu0 %v549
        %779 = vmatpush.msra.mxu0 %v541
        %780 = vmatpush.msra.mxu0 %v533
        %781 = vmatpush.msra.mxu0 %v525
        %782 = vmatpush.msra.mxu0 %v517
        %783 = vmatpush.msra.mxu0 %v509
        %784 = vmatpush.msra.mxu0 %v501
        %785 = vmatpush.msra.mxu0 %v493
        %786 = vmatpush.msra.mxu0 %v485
        %787 = vmatpush.msra.mxu0 %v477
        %788 = vmatpush.msra.mxu0 %v469
        %789 = vmatpush.msra.mxu0 %v461
        %790 = vmatpush.msra.mxu0 %v453
        %791 = vmatmul.f32.gmra.mxu0 %v320
        %v792 = vpop.f32.mrf.mxu0
        %v793 = vadd.f32 %v773, %v792
        %794 = vdwg.mxu0
        %795 = vmatpush.msra.mxu0 %v446
        %796 = vmatpush.msra.mxu0 %v438
        %797 = vmatpush.msra.mxu0 %v430
        %798 = vmatpush.msra.mxu0 %v422
        %799 = vmatpush.msra.mxu0 %v414
        %800 = vmatpush.msra.mxu0 %v406
        %801 = vmatpush.msra.mxu0 %v398
        %802 = vmatpush.msra.mxu0 %v390
        %803 = vmatpush.msra.mxu0 %v382
        %804 = vmatpush.msra.mxu0 %v374
        %805 = vmatpush.msra.mxu0 %v366
        %806 = vmatpush.msra.mxu0 %v358
        %807 = vmatpush.msra.mxu0 %v350
        %808 = vmatpush.msra.mxu0 %v342
        %809 = vmatpush.msra.mxu0 %v334
        %810 = vmatpush.msra.mxu0 %v326
        %811 = vmatmul.f32.gmra.mxu0 %v311
        %v812 = vpop.f32.mrf.mxu0
        %v813 = vadd.f32 %v584, %v812
        %814 = vdwg.mxu0
        %815 = vmatpush.msra.mxu0 %v574
        %816 = vmatpush.msra.mxu0 %v566
        %817 = vmatpush.msra.mxu0 %v558
        %818 = vmatpush.msra.mxu0 %v550
        %819 = vmatpush.msra.mxu0 %v542
        %820 = vmatpush.msra.mxu0 %v534
        %821 = vmatpush.msra.mxu0 %v526
        %822 = vmatpush.msra.mxu0 %v518
        %823 = vmatpush.msra.mxu0 %v510
        %824 = vmatpush.msra.mxu0 %v502
        %825 = vmatpush.msra.mxu0 %v494
        %826 = vmatpush.msra.mxu0 %v486
        %827 = vmatpush.msra.mxu0 %v478
        %828 = vmatpush.msra.mxu0 %v470
        %829 = vmatpush.msra.mxu0 %v462
        %830 = vmatpush.msra.mxu0 %v454
        %831 = vmatmul.f32.gmra.mxu0 %v320
        %v832 = vpop.f32.mrf.mxu0
        %v833 = vadd.f32 %v813, %v832
        %834 = vdwg.mxu0
        %835 = vmatpush.msra.mxu0 %v447
        %836 = vmatpush.msra.mxu0 %v439
        %837 = vmatpush.msra.mxu0 %v431
        %838 = vmatpush.msra.mxu0 %v423
        %839 = vmatpush.msra.mxu0 %v415
        %840 = vmatpush.msra.mxu0 %v407
        %841 = vmatpush.msra.mxu0 %v399
        %842 = vmatpush.msra.mxu0 %v391
        %843 = vmatpush.msra.mxu0 %v383
        %844 = vmatpush.msra.mxu0 %v375
        %845 = vmatpush.msra.mxu0 %v367
        %846 = vmatpush.msra.mxu0 %v359
        %847 = vmatpush.msra.mxu0 %v351
        %848 = vmatpush.msra.mxu0 %v343
        %849 = vmatpush.msra.mxu0 %v335
        %850 = vmatpush.msra.mxu0 %v327
        %851 = vmatmul.f32.gmra.mxu0 %v311
        %v852 = vpop.f32.mrf.mxu0
        %v853 = vadd.f32 %v585, %v852
        %854 = vdwg.mxu0
        %855 = vmatpush.msra.mxu0 %v575
        %856 = vmatpush.msra.mxu0 %v567
        %857 = vmatpush.msra.mxu0 %v559
        %858 = vmatpush.msra.mxu0 %v551
        %859 = vmatpush.msra.mxu0 %v543
        %860 = vmatpush.msra.mxu0 %v535
        %861 = vmatpush.msra.mxu0 %v527
        %862 = vmatpush.msra.mxu0 %v519
        %863 = vmatpush.msra.mxu0 %v511
        %864 = vmatpush.msra.mxu0 %v503
        %865 = vmatpush.msra.mxu0 %v495
        %866 = vmatpush.msra.mxu0 %v487
        %867 = vmatpush.msra.mxu0 %v479
        %868 = vmatpush.msra.mxu0 %v471
        %869 = vmatpush.msra.mxu0 %v463
        %870 = vmatpush.msra.mxu0 %v455
        %871 = vmatmul.f32.gmra.mxu0 %v320
        %v872 = vpop.f32.mrf.mxu0
        %v873 = vadd.f32 %v853, %v872
        %874 = vdwg.mxu0
        %875 = vmatpush.msra.mxu0 %v448
        %876 = vmatpush.msra.mxu0 %v440
        %877 = vmatpush.msra.mxu0 %v432
        %878 = vmatpush.msra.mxu0 %v424
        %879 = vmatpush.msra.mxu0 %v416
        %880 = vmatpush.msra.mxu0 %v408
        %881 = vmatpush.msra.mxu0 %v400
        %882 = vmatpush.msra.mxu0 %v392
        %883 = vmatpush.msra.mxu0 %v384
        %884 = vmatpush.msra.mxu0 %v376
        %885 = vmatpush.msra.mxu0 %v368
        %886 = vmatpush.msra.mxu0 %v360
        %887 = vmatpush.msra.mxu0 %v352
        %888 = vmatpush.msra.mxu0 %v344
        %889 = vmatpush.msra.mxu0 %v336
        %890 = vmatpush.msra.mxu0 %v328
        %891 = vmatmul.f32.gmra.mxu0 %v311
        %v892 = vpop.f32.mrf.mxu0
        %v893 = vadd.f32 %v586, %v892
        %894 = vdwg.mxu0
        %895 = vmatpush.msra.mxu0 %v576
        %896 = vmatpush.msra.mxu0 %v568
        %897 = vmatpush.msra.mxu0 %v560
        %898 = vmatpush.msra.mxu0 %v552
        %899 = vmatpush.msra.mxu0 %v544
        %900 = vmatpush.msra.mxu0 %v536
        %901 = vmatpush.msra.mxu0 %v528
        %902 = vmatpush.msra.mxu0 %v520
        %903 = vmatpush.msra.mxu0 %v512
        %904 = vmatpush.msra.mxu0 %v504
        %905 = vmatpush.msra.mxu0 %v496
        %906 = vmatpush.msra.mxu0 %v488
        %907 = vmatpush.msra.mxu0 %v480
        %908 = vmatpush.msra.mxu0 %v472
        %909 = vmatpush.msra.mxu0 %v464
        %910 = vmatpush.msra.mxu0 %v456
        %911 = vmatmul.f32.gmra.mxu0 %v320
        %v912 = vpop.f32.mrf.mxu0
        %v913 = vadd.f32 %v893, %v912
        %914 = vdwg.mxu0
        %v915 = vmax.f32 %v633, 0.0
        %v916 = vmax.f32 %v673, 0.0
        %v917 = vmax.f32 %v713, 0.0
        %v918 = vmax.f32 %v753, 0.0
        %v919 = vmax.f32 %v793, 0.0
        %v920 = vmax.f32 %v833, 0.0
        %v921 = vmax.f32 %v873, 0.0
        %v922 = vmax.f32 %v913, 0.0
        %923 = vst [vmem:[%s309] sm:$0xff] %v915
        %924 = vst [vmem:[%s309 + $0x8] sm:$0xff] %v916
        %925 = vst [vmem:[%s309 + $0x10] sm:$0xff] %v917
        %926 = vst [vmem:[%s309 + $0x18] sm:$0xff] %v918
        %927 = vst [vmem:[%s309 + $0x20] sm:$0xff] %v919
        %928 = vst [vmem:[%s309 + $0x28] sm:$0xff] %v920
        %929 = vst [vmem:[%s309 + $0x30] sm:$0xff] %v921
        %930 = vst [vmem:[%s309 + $0x38] sm:$0xff] %v922
        %s931 = sand.u32 %s147, 1
        %s932 = scalar_lea.sflag [#allocation4], %s931
        %s933 = sand.u32 %s147, 1
        %s934 = smul.addr %s933, 64
        %s935 = scalar_lea.vmem [#allocation10], %s934
        // Predicated region
        $region53: #{tpu_custom_call.1} parent=35 // pred_check
          %p936 = pneg %p157
        $region54: #{tpu_custom_call.1} parent=35 // pred_check_branch
          %938 = sbr.rel (%p936) target = $region56
        $region55: #{tpu_custom_call.1} parent=35 // pred_region
          %940 = vsyncadd %s932, 0
          %s941 = smul.addr %s30, 8
          %s942 = smul.addr %s29, 8
          %s943 = sadd.s32 %s941, %s942
          %s944 = smul.addr %s943, 8
          %s945 = scalar_lea.hbm %s4, %s944
          %s947 = sshll.u32 %s935, 4
          %s948 = int_to_ptr.vmem [resolvable:$true] %s947
          %s949 = sshll.u32 %s945, 4
          %s950 = int_to_ptr.hbm [resolvable:$true] %s949
          %952 = dma.vmem_to_hbm [thread:$0]  %s948, 1024, %s950, %s932
        $region56: #{tpu_custom_call.1} parent=35 // pred_fallthru
          _
      $region36: #{tpu_custom_call.1} parent=5 // pred_fallthru
        _
      %p953 = scmp.le.s32.totalorder 2, %s20
      // Predicated region
      $region57: #{tpu_custom_call.1} parent=5 // pred_check
        %p954 = pneg %p953
      $region58: #{tpu_custom_call.1} parent=5 // pred_check_branch
        %956 = sbr.rel (%p954) target = $region60
      $region59: #{tpu_custom_call.1} parent=5 // pred_region
        %s957 = ssub.s32 %s20, 2
        // Predicated region
        $region61: #{tpu_custom_call.1} parent=59 // pred_check
          %p958 = pneg %p163
        $region62: #{tpu_custom_call.1} parent=59 // pred_check_branch
          %960 = sbr.rel (%p958) target = $region64
        $region63: #{tpu_custom_call.1} parent=59 // pred_region
          %s961 = sand.u32 %s148, 1
          %s962 = scalar_lea.sflag [#allocation4], %s961
          %s963 = sand.u32 %s148, 1
          %s964 = smul.addr %s963, 64
          %s965 = scalar_lea.vmem [#allocation10], %s964
          %967 = dma.done %s962, 1024
        $region64: #{tpu_custom_call.1} parent=59 // pred_fallthru
          _
      $region60: #{tpu_custom_call.1} parent=5 // pred_fallthru
        _
    $region6: #{tpu_custom_call.1} parent=1 // loop_footer
      %s24 = sadd.s32 1, %s20
    $region7: #{tpu_custom_call.1} parent=1 // loop_footer_branch
      %19 = sbr.rel target = $region3
    $region8: #{tpu_custom_call.1} parent=1 // loop_exit
      _
    %968 = vsyncpa [#allocation3], 1
    %s969 = scalar_lea.sflag [#allocation3], 1
    %970 = vsyncpa %s969, 1
    %971 = vsyncpa [#allocation6], 1
    %s972 = scalar_lea.sflag [#allocation6], 1
    %973 = vsyncpa %s972, 1
    %974 = vsyncpa [#allocation9], 1
    %975 = vsyncpa [#allocation4], 1
    %s976 = scalar_lea.sflag [#allocation4], 1
    %977 = vsyncpa %s976, 1

</llo_original>
